<compile_context>
chip_gen: v7x
topology: tpu7x:2x2x1
jax: 0.10.0
libtpu: 0.0.40
codegen_flags: <defaults>
</compile_context>

<pallas_src>
import jax
import jax.numpy as jnp
from jax.experimental import pallas as pl
from jax.experimental.pallas import tpu as pltpu

LANE = 128
SUBLANE = 8


def _round_up(n, m):
    return ((n + m - 1) // m) * m


# ------------------------------ Pallas kernel -------------------------------

def linear_kernel(x_ref, w_ref, b_ref, o_ref):
    # x_ref: (TM, Kpad) bf16, w_ref: (Kpad, Npad) bf16, b_ref: (1, Npad) f32
    acc = jnp.dot(x_ref[...], w_ref[...], preferred_element_type=jnp.float32)
    o_ref[...] = acc + b_ref[...]          # f32 VPU add, lane-dense store


# -------------------------------- wrapper ------------------------------------

def linear_forward(params, x, *, block_m=256):
    """nn.Linear forward: y = x @ W.T + b (W stored PyTorch-style (out, in))."""
    w, b = params["weight"], params["bias"]
    out_dim, in_dim = w.shape
    batch = x.shape[0]

    k_pad = _round_up(in_dim, LANE)                       # lane-aligned K
    n_pad = _round_up(max(out_dim, LANE), LANE)           # lane-dense output
    tm = min(block_m, _round_up(batch, SUBLANE))          # 8 <= TM <= 256
    m_pad = _round_up(batch, tm)

    # bf16 matmul operands (native MXU path), zero-padded to aligned shapes.
    x_p = jnp.zeros((m_pad, k_pad), jnp.bfloat16).at[:batch, :in_dim].set(
        x.astype(jnp.bfloat16))
    w_p = jnp.zeros((k_pad, n_pad), jnp.bfloat16).at[:in_dim, :out_dim].set(
        w.T.astype(jnp.bfloat16))
    b_p = jnp.zeros((1, n_pad), jnp.float32).at[0, :out_dim].set(
        b.astype(jnp.float32))

    y_pad = pl.pallas_call(
        linear_kernel,
        out_shape=jax.ShapeDtypeStruct((m_pad, n_pad), jnp.float32),
        grid_spec=pltpu.PrefetchScalarGridSpec(
            num_scalar_prefetch=0,
            grid=(m_pad // tm,),
            in_specs=[
                pl.BlockSpec((tm, k_pad), lambda i: (i, 0)),     # row tiles
                pl.BlockSpec((k_pad, n_pad), lambda i: (0, 0)),  # resident W
                pl.BlockSpec((1, n_pad), lambda i: (0, 0)),      # resident bias
            ],
            out_specs=pl.BlockSpec((tm, n_pad), lambda i: (i, 0)),
        ),
        compiler_params=pltpu.CompilerParams(
            dimension_semantics=("parallel",),        # megacore-friendly M axis
            vmem_limit_bytes=32 * 1024 * 1024,        # portable on v7x (64 MiB)
        ),
    )(x_p, w_p, b_p)

    return y_pad[:batch, :out_dim]


# --------------------------- deterministic params ----------------------------

def init_params(key, *, nb_classes=10, feat=512):
    kw, kb = jax.random.split(key)
    bound = 1.0 / jnp.sqrt(jnp.float32(feat))
    weight = jax.random.uniform(kw, (nb_classes, feat), jnp.float32, -bound, bound)
    bias = jax.random.uniform(kb, (nb_classes,), jnp.float32, -bound, bound)
    return {"weight": weight, "bias": bias}


if __name__ == "__main__":
    key = jax.random.PRNGKey(0)
    kp, kx = jax.random.split(key)

    nb_classes, feat, B = 10, 512, 2
    params = init_params(kp, nb_classes=nb_classes, feat=feat)
    x = jax.random.normal(kx, (B, feat), jnp.float32)

    fwd = jax.jit(linear_forward)
    y = fwd(params, x)
    jax.block_until_ready(y)

    # Reference with the same bf16-cast operands (bf16 x bf16 -> f32 accumulate).
    ref = (x.astype(jnp.bfloat16).astype(jnp.float32)
           @ params["weight"].T.astype(jnp.bfloat16).astype(jnp.float32)
           + params["bias"])

    assert y.shape == (B, nb_classes)
    assert jnp.allclose(y, ref, rtol=1e-3, atol=1e-3)
    print("KERNEL_OK")
</pallas_src>

<mosaic_0001>
module attributes {stable_mosaic.version = 11 : i64} {
  func.func @linear_kernel(%arg0: i32, %arg1: memref<8x512xbf16, #tpu.memory_space<vmem>>, %arg2: memref<512x128xbf16, #tpu.memory_space<vmem>>, %arg3: memref<1x128xf32, #tpu.memory_space<vmem>>, %arg4: memref<8x128xf32, #tpu.memory_space<vmem>>) attributes {dimension_semantics = [#tpu.dimension_semantics<parallel>], iteration_bounds = array<i64: 1>, scalar_prefetch = 0 : i64, scratch_operands = 0 : i64, tpu.core_type = #tpu.core_type<tc>, window_params = [{transform_indices = @transform_0, window_bounds = array<i64: 8, 512>}, {pipeline_mode = #tpu.pipeline_mode<synchronous>, transform_indices = @transform_1, window_bounds = array<i64: 512, 128>}, {pipeline_mode = #tpu.pipeline_mode<synchronous>, transform_indices = @transform_2, window_bounds = array<i64: 1, 128>}, {transform_indices = @transform_3, window_bounds = array<i64: 8, 128>}]} {
    %c0 = arith.constant 0 : index
    %c0_0 = arith.constant 0 : index
    %0 = vector.load %arg1[%c0, %c0_0] : memref<8x512xbf16, #tpu.memory_space<vmem>>, vector<8x512xbf16>
    %c0_1 = arith.constant 0 : index
    %c0_2 = arith.constant 0 : index
    %1 = vector.load %arg2[%c0_1, %c0_2] : memref<512x128xbf16, #tpu.memory_space<vmem>>, vector<512x128xbf16>
    %cst = arith.constant dense<0.000000e+00> : vector<8x128xf32>
    %2 = tpu.matmul %0, %1, %cst {dimension_numbers = #tpu.dot_dimension_numbers<[1], [0], [0], [1], [0, 0, 1, 1], [], []>} : vector<8x512xbf16>, vector<512x128xbf16>, vector<8x128xf32> -> vector<8x128xf32>
    %c0_3 = arith.constant 0 : index
    %c0_4 = arith.constant 0 : index
    %3 = vector.load %arg3[%c0_3, %c0_4] : memref<1x128xf32, #tpu.memory_space<vmem>>, vector<1x128xf32>
    %4 = vector.broadcast %3 : vector<1x128xf32> to vector<8x128xf32>
    %5 = arith.addf %2, %4 : vector<8x128xf32>
    %c0_5 = arith.constant 0 : index
    %c0_6 = arith.constant 0 : index
    %6 = vector.load %arg4[%c0_5, %c0_6] : memref<8x128xf32, #tpu.memory_space<vmem>>, vector<8x128xf32>
    tpu.vector_store %arg4[%c0_5, %c0_6], %5 {strides = array<i32>} : memref<8x128xf32, #tpu.memory_space<vmem>>, vector<8x128xf32>,
    return
  }
  func.func @transform_0(%arg0: i32) -> (i32, i32) {
    %c0_i32 = arith.constant 0 : i32
    %c0_i32_0 = arith.constant 0 : i32
    return %arg0, %c0_i32 : i32, i32
  }
  func.func @transform_1(%arg0: i32) -> (i32, i32) {
    %c0_i32 = arith.constant 0 : i32
    %c0_i32_0 = arith.constant 0 : i32
    %c0_i32_1 = arith.constant 0 : i32
    return %c0_i32, %c0_i32_0 : i32, i32
  }
  func.func @transform_2(%arg0: i32) -> (i32, i32) {
    %c0_i32 = arith.constant 0 : i32
    %c0_i32_0 = arith.constant 0 : i32
    %c0_i32_1 = arith.constant 0 : i32
    return %c0_i32, %c0_i32_0 : i32, i32
  }
  func.func @transform_3(%arg0: i32) -> (i32, i32) {
    %c0_i32 = arith.constant 0 : i32
    %c0_i32_0 = arith.constant 0 : i32
    return %arg0, %c0_i32 : i32, i32
  }
}

</mosaic_0001>

<llo_original>
// kernel: linear_forward.1
$region0: #{linear_forward.1}
  #allocation0 [shape = 'u32[]', space=smem, size = 0x4, offset = 0x4, fixed_abs, tag = 'smem constant byte address 0x4 - core index']
  #allocation1 [shape = 'u32[144,128]{1,0:T(1,128)}', space=vmem, size = 0x12000, scoped, tag = 'internal scratch']
  %s0 = inlined_call_operand.vmem [shape: bf16[8,512], index: 0, kind: input, shape index: {}]
  %s1 = inlined_call_operand.vmem [shape: bf16[512,128], index: 1, kind: input, shape index: {}]
  %s2 = inlined_call_operand.vmem [shape: f32[1,128], index: 2, kind: input, shape index: {}]
  %s3 = inlined_call_operand.vmem [shape: f32[8,128], index: 3, kind: output, shape index: {}]
  %s4 = sld [smem:[#allocation0]]
  $region22: #{linear_forward.1} parent=0
    _
  %s6 = ssub.s32 1, %s4
  %s7 = scalar_select 0, %s6, %s4
  // Predicated region
  $region2: #{linear_forward.1} parent=0 // pred_check
    _
  $region3: #{linear_forward.1} parent=0 // pred_check_branch
    %9 = sbr.rel (0) target = $region5
  $region4: #{linear_forward.1} parent=0 // pred_region
    _
  $region5: #{linear_forward.1} parent=0 // pred_fallthru
    _
  // Predicated region
  $region6: #{linear_forward.1} parent=0 // pred_check
    _
  $region7: #{linear_forward.1} parent=0 // pred_check_branch
    %11 = sbr.rel (0) target = $region9
  $region8: #{linear_forward.1} parent=0 // pred_region
    _
  $region9: #{linear_forward.1} parent=0 // pred_fallthru
    _
  // Predicated region
  $region10: #{linear_forward.1} parent=0 // pred_check
    _
  $region11: #{linear_forward.1} parent=0 // pred_check_branch
    %13 = sbr.rel (0) target = $region13
  $region12: #{linear_forward.1} parent=0 // pred_region
    _
  $region13: #{linear_forward.1} parent=0 // pred_fallthru
    _
  %v15 = vld [vmem:[%s0] sm:$0xff]
  %v16 = vld [vmem:[%s0 + $0x8] sm:$0xff]
  %v17 = vld [vmem:[%s1] sm:$0xf]
  %v18 = vld [vmem:[%s1 + $0x4] sm:$0xf]
  %v19 = vld [vmem:[%s1 + $0x8] sm:$0xf]
  %v20 = vld [vmem:[%s1 + $0xc] sm:$0xf]
  %v21 = vld [vmem:[%s1 + $0x10] sm:$0xf]
  %v22 = vld [vmem:[%s1 + $0x14] sm:$0xf]
  %v23 = vld [vmem:[%s1 + $0x18] sm:$0xf]
  %v24 = vld [vmem:[%s1 + $0x1c] sm:$0xf]
  %v25 = vld [vmem:[%s1 + $0x20] sm:$0xf]
  %v26 = vld [vmem:[%s1 + $0x24] sm:$0xf]
  %v27 = vld [vmem:[%s1 + $0x28] sm:$0xf]
  %v28 = vld [vmem:[%s1 + $0x2c] sm:$0xf]
  %v29 = vld [vmem:[%s1 + $0x30] sm:$0xf]
  %v30 = vld [vmem:[%s1 + $0x34] sm:$0xf]
  %v31 = vld [vmem:[%s1 + $0x38] sm:$0xf]
  %v32 = vld [vmem:[%s1 + $0x3c] sm:$0xf]
  %v33 = vld [vmem:[%s1 + $0x40] sm:$0xf]
  %v34 = vld [vmem:[%s1 + $0x44] sm:$0xf]
  %v35 = vld [vmem:[%s1 + $0x48] sm:$0xf]
  %v36 = vld [vmem:[%s1 + $0x4c] sm:$0xf]
  %v37 = vld [vmem:[%s1 + $0x50] sm:$0xf]
  %v38 = vld [vmem:[%s1 + $0x54] sm:$0xf]
  %v39 = vld [vmem:[%s1 + $0x58] sm:$0xf]
  %v40 = vld [vmem:[%s1 + $0x5c] sm:$0xf]
  %v41 = vld [vmem:[%s1 + $0x60] sm:$0xf]
  %v42 = vld [vmem:[%s1 + $0x64] sm:$0xf]
  %v43 = vld [vmem:[%s1 + $0x68] sm:$0xf]
  %v44 = vld [vmem:[%s1 + $0x6c] sm:$0xf]
  %v45 = vld [vmem:[%s1 + $0x70] sm:$0xf]
  %v46 = vld [vmem:[%s1 + $0x74] sm:$0xf]
  %v47 = vld [vmem:[%s1 + $0x78] sm:$0xf]
  %v48 = vld [vmem:[%s1 + $0x7c] sm:$0xf]
  %v49 = vld [vmem:[%s1 + $0x80] sm:$0xf]
  %v50 = vld [vmem:[%s1 + $0x84] sm:$0xf]
  %v51 = vld [vmem:[%s1 + $0x88] sm:$0xf]
  %v52 = vld [vmem:[%s1 + $0x8c] sm:$0xf]
  %v53 = vld [vmem:[%s1 + $0x90] sm:$0xf]
  %v54 = vld [vmem:[%s1 + $0x94] sm:$0xf]
  %v55 = vld [vmem:[%s1 + $0x98] sm:$0xf]
  %v56 = vld [vmem:[%s1 + $0x9c] sm:$0xf]
  %v57 = vld [vmem:[%s1 + $0xa0] sm:$0xf]
  %v58 = vld [vmem:[%s1 + $0xa4] sm:$0xf]
  %v59 = vld [vmem:[%s1 + $0xa8] sm:$0xf]
  %v60 = vld [vmem:[%s1 + $0xac] sm:$0xf]
  %v61 = vld [vmem:[%s1 + $0xb0] sm:$0xf]
  %v62 = vld [vmem:[%s1 + $0xb4] sm:$0xf]
  %v63 = vld [vmem:[%s1 + $0xb8] sm:$0xf]
  %v64 = vld [vmem:[%s1 + $0xbc] sm:$0xf]
  %v65 = vld [vmem:[%s1 + $0xc0] sm:$0xf]
  %v66 = vld [vmem:[%s1 + $0xc4] sm:$0xf]
  %v67 = vld [vmem:[%s1 + $0xc8] sm:$0xf]
  %v68 = vld [vmem:[%s1 + $0xcc] sm:$0xf]
  %v69 = vld [vmem:[%s1 + $0xd0] sm:$0xf]
  %v70 = vld [vmem:[%s1 + $0xd4] sm:$0xf]
  %v71 = vld [vmem:[%s1 + $0xd8] sm:$0xf]
  %v72 = vld [vmem:[%s1 + $0xdc] sm:$0xf]
  %v73 = vld [vmem:[%s1 + $0xe0] sm:$0xf]
  %v74 = vld [vmem:[%s1 + $0xe4] sm:$0xf]
  %v75 = vld [vmem:[%s1 + $0xe8] sm:$0xf]
  %v76 = vld [vmem:[%s1 + $0xec] sm:$0xf]
  %v77 = vld [vmem:[%s1 + $0xf0] sm:$0xf]
  %v78 = vld [vmem:[%s1 + $0xf4] sm:$0xf]
  %v79 = vld [vmem:[%s1 + $0xf8] sm:$0xf]
  %v80 = vld [vmem:[%s1 + $0xfc] sm:$0xf]
  %v81 = vld [vmem:[%s2] sm:$0x1]
  %v83 = vlaneseq
  %v84 = vshrl.u32 %v83, 7
  %v85 = vsub.s32 0, %v84
  %v86 = vrot.slane %v81, %v85
  %v90 = vunpack.c.l.b16 %v15
  %v91 = vunpack.c.h.b16 %v15
  %v92 = vunpack.c.l.b16 %v16
  %v93 = vunpack.c.h.b16 %v16
  %v94 = vpack.c.b16 %v90, %v90
  %v95 = vpack.c.b16 %v91, %v91
  %v96 = vpack.c.b16 %v92, %v92
  %v97 = vpack.c.b16 %v93, %v93
  %v166 = vunpack.c.l.b16 %v17
  %v167 = vunpack.c.l.b16 %v18
  %v168 = vunpack.c.l.b16 %v19
  %v169 = vunpack.c.l.b16 %v20
  %v170 = vunpack.c.l.b16 %v21
  %v171 = vunpack.c.l.b16 %v22
  %v172 = vunpack.c.l.b16 %v23
  %v173 = vunpack.c.l.b16 %v24
  %v174 = vunpack.c.l.b16 %v25
  %v175 = vunpack.c.l.b16 %v26
  %v176 = vunpack.c.l.b16 %v27
  %v177 = vunpack.c.l.b16 %v28
  %v178 = vunpack.c.l.b16 %v29
  %v179 = vunpack.c.l.b16 %v30
  %v180 = vunpack.c.l.b16 %v31
  %v181 = vunpack.c.l.b16 %v32
  %v182 = vunpack.c.l.b16 %v33
  %v183 = vunpack.c.l.b16 %v34
  %v184 = vunpack.c.l.b16 %v35
  %v185 = vunpack.c.l.b16 %v36
  %v186 = vunpack.c.l.b16 %v37
  %v187 = vunpack.c.l.b16 %v38
  %v188 = vunpack.c.l.b16 %v39
  %v189 = vunpack.c.l.b16 %v40
  %v190 = vunpack.c.l.b16 %v41
  %v191 = vunpack.c.l.b16 %v42
  %v192 = vunpack.c.l.b16 %v43
  %v193 = vunpack.c.l.b16 %v44
  %v194 = vunpack.c.l.b16 %v45
  %v195 = vunpack.c.l.b16 %v46
  %v196 = vunpack.c.l.b16 %v47
  %v197 = vunpack.c.l.b16 %v48
  %v198 = vunpack.c.l.b16 %v49
  %v199 = vunpack.c.l.b16 %v50
  %v200 = vunpack.c.l.b16 %v51
  %v201 = vunpack.c.l.b16 %v52
  %v202 = vunpack.c.l.b16 %v53
  %v203 = vunpack.c.l.b16 %v54
  %v204 = vunpack.c.l.b16 %v55
  %v205 = vunpack.c.l.b16 %v56
  %v206 = vunpack.c.l.b16 %v57
  %v207 = vunpack.c.l.b16 %v58
  %v208 = vunpack.c.l.b16 %v59
  %v209 = vunpack.c.l.b16 %v60
  %v210 = vunpack.c.l.b16 %v61
  %v211 = vunpack.c.l.b16 %v62
  %v212 = vunpack.c.l.b16 %v63
  %v213 = vunpack.c.l.b16 %v64
  %v214 = vunpack.c.l.b16 %v65
  %v215 = vunpack.c.l.b16 %v66
  %v216 = vunpack.c.l.b16 %v67
  %v217 = vunpack.c.l.b16 %v68
  %v218 = vunpack.c.l.b16 %v69
  %v219 = vunpack.c.l.b16 %v70
  %v220 = vunpack.c.l.b16 %v71
  %v221 = vunpack.c.l.b16 %v72
  %v222 = vunpack.c.l.b16 %v73
  %v223 = vunpack.c.l.b16 %v74
  %v224 = vunpack.c.l.b16 %v75
  %v225 = vunpack.c.l.b16 %v76
  %v226 = vunpack.c.l.b16 %v77
  %v227 = vunpack.c.l.b16 %v78
  %v228 = vunpack.c.l.b16 %v79
  %v229 = vunpack.c.l.b16 %v80
  %v230 = vpack.c.b16 %v167, %v166
  %v231 = vpack.c.b16 %v169, %v168
  %v232 = vpack.c.b16 %v171, %v170
  %v233 = vpack.c.b16 %v173, %v172
  %v234 = vpack.c.b16 %v175, %v174
  %v235 = vpack.c.b16 %v177, %v176
  %v236 = vpack.c.b16 %v179, %v178
  %v237 = vpack.c.b16 %v181, %v180
  %v238 = vpack.c.b16 %v183, %v182
  %v239 = vpack.c.b16 %v185, %v184
  %v240 = vpack.c.b16 %v187, %v186
  %v241 = vpack.c.b16 %v189, %v188
  %v242 = vpack.c.b16 %v191, %v190
  %v243 = vpack.c.b16 %v193, %v192
  %v244 = vpack.c.b16 %v195, %v194
  %v245 = vpack.c.b16 %v197, %v196
  %v246 = vpack.c.b16 %v199, %v198
  %v247 = vpack.c.b16 %v201, %v200
  %v248 = vpack.c.b16 %v203, %v202
  %v249 = vpack.c.b16 %v205, %v204
  %v250 = vpack.c.b16 %v207, %v206
  %v251 = vpack.c.b16 %v209, %v208
  %v252 = vpack.c.b16 %v211, %v210
  %v253 = vpack.c.b16 %v213, %v212
  %v254 = vpack.c.b16 %v215, %v214
  %v255 = vpack.c.b16 %v217, %v216
  %v256 = vpack.c.b16 %v219, %v218
  %v257 = vpack.c.b16 %v221, %v220
  %v258 = vpack.c.b16 %v223, %v222
  %v259 = vpack.c.b16 %v225, %v224
  %v260 = vpack.c.b16 %v227, %v226
  %v261 = vpack.c.b16 %v229, %v228
  %294 = vmatprep.subr.bf16.mxu0 0
  %295 = vmatpush1.bf16.msra.mxu0 %v230
  %296 = vmatprep.subr.bf16.mxu0 0
  %297 = vmatpush1.bf16.msra.mxu0 %v231
  %298 = vmatprep.subr.bf16.mxu0 0
  %299 = vmatpush1.bf16.msra.mxu0 %v232
  %300 = vmatprep.subr.bf16.mxu0 0
  %301 = vmatpush1.bf16.msra.mxu0 %v233
  %302 = vmatprep.subr.bf16.mxu0 0
  %303 = vmatpush1.bf16.msra.mxu0 %v234
  %304 = vmatprep.subr.bf16.mxu0 0
  %305 = vmatpush1.bf16.msra.mxu0 %v235
  %306 = vmatprep.subr.bf16.mxu0 0
  %307 = vmatpush1.bf16.msra.mxu0 %v236
  %308 = vmatprep.subr.bf16.mxu0 0
  %309 = vmatpush1.bf16.msra.mxu0 %v237
  %310 = vmatprep.subr.bf16.mxu0 0
  %311 = vmatpush1.bf16.msra.mxu0 %v238
  %312 = vmatprep.subr.bf16.mxu0 0
  %313 = vmatpush1.bf16.msra.mxu0 %v239
  %314 = vmatprep.subr.bf16.mxu0 0
  %315 = vmatpush1.bf16.msra.mxu0 %v240
  %316 = vmatprep.subr.bf16.mxu0 0
  %317 = vmatpush1.bf16.msra.mxu0 %v241
  %318 = vmatprep.subr.bf16.mxu0 0
  %319 = vmatpush1.bf16.msra.mxu0 %v242
  %320 = vmatprep.subr.bf16.mxu0 0
  %321 = vmatpush1.bf16.msra.mxu0 %v243
  %322 = vmatprep.subr.bf16.mxu0 0
  %323 = vmatpush1.bf16.msra.mxu0 %v244
  %324 = vmatprep.subr.bf16.mxu0 0
  %325 = vmatpush1.bf16.msra.mxu0 %v245
  %326 = vmatprep.mubr.bf16.mxu0 %v95
  %327 = vmatmul.mubr.bf16.gmra.mrb[0].mxu0 %v94
  %v328 = vpop.f32.mrb[0].mxu0
  %v329 = vadd.f32 %v86, %v328
  %v330 = vpop.f32.mrb[0].mxu0
  %v331 = vpop.f32.mrb[0].mxu0
  %v332 = vpop.f32.mrb[0].mxu0
  %333 = vdwg.mxu0
  %334 = vmatprep.subr.bf16.mxu0 0
  %335 = vmatpush1.bf16.msra.mxu0 %v246
  %336 = vmatprep.subr.bf16.mxu0 0
  %337 = vmatpush1.bf16.msra.mxu0 %v247
  %338 = vmatprep.subr.bf16.mxu0 0
  %339 = vmatpush1.bf16.msra.mxu0 %v248
  %340 = vmatprep.subr.bf16.mxu0 0
  %341 = vmatpush1.bf16.msra.mxu0 %v249
  %342 = vmatprep.subr.bf16.mxu0 0
  %343 = vmatpush1.bf16.msra.mxu0 %v250
  %344 = vmatprep.subr.bf16.mxu0 0
  %345 = vmatpush1.bf16.msra.mxu0 %v251
  %346 = vmatprep.subr.bf16.mxu0 0
  %347 = vmatpush1.bf16.msra.mxu0 %v252
  %348 = vmatprep.subr.bf16.mxu0 0
  %349 = vmatpush1.bf16.msra.mxu0 %v253
  %350 = vmatprep.subr.bf16.mxu0 0
  %351 = vmatpush1.bf16.msra.mxu0 %v254
  %352 = vmatprep.subr.bf16.mxu0 0
  %353 = vmatpush1.bf16.msra.mxu0 %v255
  %354 = vmatprep.subr.bf16.mxu0 0
  %355 = vmatpush1.bf16.msra.mxu0 %v256
  %356 = vmatprep.subr.bf16.mxu0 0
  %357 = vmatpush1.bf16.msra.mxu0 %v257
  %358 = vmatprep.subr.bf16.mxu0 0
  %359 = vmatpush1.bf16.msra.mxu0 %v258
  %360 = vmatprep.subr.bf16.mxu0 0
  %361 = vmatpush1.bf16.msra.mxu0 %v259
  %362 = vmatprep.subr.bf16.mxu0 0
  %363 = vmatpush1.bf16.msra.mxu0 %v260
  %364 = vmatprep.subr.bf16.mxu0 0
  %365 = vmatpush1.bf16.msra.mxu0 %v261
  %366 = vmatprep.mubr.bf16.mxu0 %v97
  %367 = vmatmul.mubr.bf16.gmra.mrb[0].mxu0 %v96
  %v368 = vpop.f32.mrb[0].mxu0
  %v369 = vadd.f32 %v329, %v368
  %v370 = vpop.f32.mrb[0].mxu0
  %v371 = vpop.f32.mrb[0].mxu0
  %v372 = vpop.f32.mrb[0].mxu0
  %373 = vdwg.mxu0
  %374 = vst [vmem:[%s3] sm:$0xff] %v369
  // Predicated region
  $region14: #{linear_forward.1} parent=0 // pred_check
    _
  $region15: #{linear_forward.1} parent=0 // pred_check_branch
    %376 = sbr.rel (0) target = $region17
  $region16: #{linear_forward.1} parent=0 // pred_region
    _
  $region17: #{linear_forward.1} parent=0 // pred_fallthru
    _
  // Predicated region
  $region18: #{linear_forward.1} parent=0 // pred_check
    _
  $region19: #{linear_forward.1} parent=0 // pred_check_branch
    %378 = sbr.rel (0) target = $region21
  $region20: #{linear_forward.1} parent=0 // pred_region
    _
  $region21: #{linear_forward.1} parent=0 // pred_fallthru
    _

</llo_original>
